<compile_context>
chip_gen: v5e
topology: v5e:2x2
jax: 0.10.0
libtpu: 0.0.40
codegen_flags: <defaults>
</compile_context>

<pallas_src>
import functools

import jax
import jax.numpy as jnp
from jax import lax
from jax.experimental import pallas as pl
from jax.experimental.pallas import tpu as pltpu


def _dwconv_kernel(w_ref, x_ref, o_ref, *scratch, K, P, H, W, Ho, Wo, Ct, RB,
                   channelwise):
    """One program: depthwise conv of a (Ct, H, W) NCHW channel-tile.

    w_ref   : SMEM f32 taps, flat (K*K,) if channelwise else (C*K*K,).
    x_ref   : VMEM (Ct, H, W) input tile (W on lanes, H on sublanes).
    o_ref   : VMEM (Ct, Ho, Wo) output tile.
    scratch : (pad_ref,) VMEM (Ct, H+2P, W+2P) in the *input* dtype iff P > 0.
    """
    KK = K * K

    if P > 0:
        pad_ref = scratch[0]
        dt = x_ref.dtype
        Wp = W + 2 * P
        # Zero only the P-wide border slabs; the interior is overwritten below
        # (no wasted full-tile zero pass through the store slot).
        pad_ref[:, :P, :] = jnp.zeros((Ct, P, Wp), dt)
        pad_ref[:, P + H:, :] = jnp.zeros((Ct, P, Wp), dt)
        pad_ref[:, P:P + H, :P] = jnp.zeros((Ct, H, P), dt)
        pad_ref[:, P:P + H, P + W:] = jnp.zeros((Ct, H, P), dt)
        # Single interior copy, kept in the input dtype (bf16 stays bf16).
        pad_ref[:, P:P + H, P:P + W] = x_ref[...]
        src = pad_ref
    else:
        src = x_ref

    c_base = pl.program_id(1) * Ct          # global channel offset of this tile
    n_bands = pl.cdiv(Ho, RB)               # static trip count

    # Shared-filter taps: read the 9 scalars from SMEM exactly once.
    shared_taps = [w_ref[t] for t in range(KK)] if channelwise else None

    def chan_body(c, carry):
        if channelwise:
            taps = shared_taps
        else:
            base = (c_base + c) * KK
            taps = [w_ref[base + t] for t in range(KK)]   # per-channel scalars

        def band_body(b, carry_b):
            # Clamp the last band so the slice size stays static; the overlap
            # rows are simply re-stored with identical values.
            r0 = jnp.minimum(b * RB, Ho - RB)
            # Register-band accumulation: unroll the K*K taps into one f32
            # expression and store the band exactly once (no acc scratch RMW).
            acc = None
            for i in range(K):
                for j in range(K):
                    win = src[c, pl.ds(r0 + i, RB), j:j + Wo].astype(jnp.float32)
                    term = taps[i * K + j] * win
                    acc = term if acc is None else acc + term
            o_ref[c, pl.ds(r0, RB), :] = acc.astype(o_ref.dtype)
            return carry_b

        return lax.fori_loop(0, n_bands, band_body, carry)

    lax.fori_loop(0, Ct, chan_body, 0)


def _vmem_budget():
    """Per-generation VMEM budget for the channel tile (v7x: 64 MiB core,
    v5e/v6e: 128 MiB) and the physical capacity."""
    cap = 64 * 1024 * 1024                      # conservative fallback (v7x)
    try:
        cap = int(pltpu.get_tpu_info().vmem_capacity_bytes)
    except Exception:
        pass
    budget = min(int(0.45 * cap), 56 * 1024 * 1024)   # ~28 MiB v7x, ~56 MiB v5e/v6e
    return budget, cap


def _pick_channel_tile(N, C, per_c_vmem, budget):
    """Channels per program: as many as fit the VMEM budget, shrunk to a
    divisor of C, then shrunk further (when possible) so the grid has >= 2
    programs -- keeps both v7x TensorCores busy and gives the input/output
    pipeline something to overlap."""
    ct = max(1, min(C, budget // per_c_vmem))
    while C % ct:
        ct -= 1
    while N * (C // ct) < 2 and ct > 1:
        nxt = ct - 1
        while C % nxt:
            nxt -= 1
        ct = nxt
    return ct


def channelwise_conv2d(x, kernel, kernel_size, padding=0, channelwise=True):
    """Equivalent of ChannelWiseConv2d.forward.

    x      : (N, C, H, W)
    kernel : (1, 1, K, K) if channelwise else (C, 1, K, K)
    """
    N, C, H, W = x.shape
    K = int(kernel_size)
    P = int(padding)
    Hp, Wp = H + 2 * P, W + 2 * P
    Ho, Wo = Hp - K + 1, Wp - K + 1
    assert Ho > 0 and Wo > 0, "kernel larger than padded input"

    itemsize = jnp.dtype(x.dtype).itemsize
    budget, vmem_cap = _vmem_budget()

    # VMEM per channel: double-buffered input + output blocks + padded scratch.
    pad_bytes = Hp * Wp * itemsize if P > 0 else 0
    per_c = (2 * H * W + 2 * Ho * Wo) * itemsize + pad_bytes
    if per_c > budget:
        # TODO(synk): H-band grid axis with (K-1)-row halo for huge spatial.
        raise ValueError(
            f"spatial extent {H}x{W} needs {per_c} VMEM bytes per channel, "
            f"exceeding the {budget}-byte budget; H-band tiling not implemented")

    Ct = _pick_channel_tile(N, C, per_c, budget)
    grid = (N, C // Ct)

    KK = K * K
    if channelwise:
        # Single shared filter: flat (K*K,) f32 scalar taps in SMEM.
        w = jnp.asarray(kernel, jnp.float32).reshape(KK)
    else:
        # Per-channel filters: flat (C*K*K,) f32 taps in SMEM (1-D avoids the
        # 2-D SMEM padding blow-up); indexed as (c*KK + i*K + j).
        w = jnp.asarray(kernel, jnp.float32).reshape(C * KK)
    w_spec = pl.BlockSpec(memory_space=pltpu.SMEM)

    # Output-row band size: ~8 rows, shrunk for very wide rows so the 9-tap
    # register accumulation stays comfortably inside the vreg file.
    RB = max(1, min(8, Ho, 2048 // max(Wo, 1)))

    # vmem_limit: actual requirement + 25% margin (never the full physical
    # VMEM of a v7x core), with a floor covering v5e's 16 MiB scoped default.
    vmem_need = Ct * per_c
    vmem_limit = int(vmem_need * 1.25) + (2 << 20)
    vmem_limit = max(vmem_limit, 16 << 20)
    vmem_limit = min(vmem_limit, int(0.85 * vmem_cap))

    kern = functools.partial(_dwconv_kernel, K=K, P=P, H=H, W=W, Ho=Ho, Wo=Wo,
                             Ct=Ct, RB=RB, channelwise=channelwise)

    flops = int(2 * N * C * Ho * Wo * KK)
    bytes_accessed = int(N * C * (H * W + Ho * Wo) * itemsize + w.size * 4)

    scratch_shapes = [pltpu.VMEM((Ct, Hp, Wp), x.dtype)] if P > 0 else []

    return pl.pallas_call(
        kern,
        out_shape=jax.ShapeDtypeStruct((N, C, Ho, Wo), x.dtype),
        grid=grid,
        in_specs=[
            w_spec,
            pl.BlockSpec((None, Ct, H, W), lambda n, c: (n, c, 0, 0)),
        ],
        out_specs=pl.BlockSpec((None, Ct, Ho, Wo), lambda n, c: (n, c, 0, 0)),
        scratch_shapes=scratch_shapes,
        compiler_params=pltpu.CompilerParams(
            dimension_semantics=("parallel", "parallel"),
            vmem_limit_bytes=vmem_limit,
        ),
        cost_estimate=pl.CostEstimate(
            flops=flops, transcendentals=0, bytes_accessed=bytes_accessed),
    )(w, x)


def _reference(x, kernel, kernel_size, padding, channelwise=True):
    """Pure-JAX reference matching F.conv2d(x, w, groups=C, padding=p)."""
    C = x.shape[1]
    K = kernel_size
    if channelwise:
        w = jnp.broadcast_to(kernel, (C, 1, K, K))
    else:
        w = kernel
    return jax.lax.conv_general_dilated(
        x, w,
        window_strides=(1, 1),
        padding=[(padding, padding), (padding, padding)],
        dimension_numbers=("NCHW", "OIHW", "NCHW"),
        feature_group_count=C,
    )


if __name__ == "__main__":
    key = jax.random.PRNGKey(0)
    kx, k1, k2 = jax.random.split(key, 3)

    # Small shapes consistent with the module's forward (NCHW input).
    N, C, H, W = 2, 4, 16, 16
    K, P = 3, 1

    x = jax.random.normal(kx, (N, C, H, W), dtype=jnp.float32)

    # channelwise=True: single shared (1, 1, K, K) filter (module default).
    kern_shared = jax.random.normal(k1, (1, 1, K, K), dtype=jnp.float32)
    out = channelwise_conv2d(x, kern_shared, kernel_size=K, padding=P,
                             channelwise=True)
    out = jax.block_until_ready(out)
    ref = _reference(x, kern_shared, K, P, channelwise=True)
    assert out.shape == ref.shape, (out.shape, ref.shape)
    assert jnp.allclose(out, ref, atol=1e-5, rtol=1e-5), \
        "mismatch vs reference conv (channelwise=True)"

    # channelwise=False: per-channel (C, 1, K, K) filters.
    kern_perch = jax.random.normal(k2, (C, 1, K, K), dtype=jnp.float32)
    out2 = channelwise_conv2d(x, kern_perch, kernel_size=K, padding=P,
                              channelwise=False)
    out2 = jax.block_until_ready(out2)
    ref2 = _reference(x, kern_perch, K, P, channelwise=False)
    assert out2.shape == ref2.shape, (out2.shape, ref2.shape)
    assert jnp.allclose(out2, ref2, atol=1e-5, rtol=1e-5), \
        "mismatch vs reference conv (channelwise=False)"

    print("KERNEL_OK")
</pallas_src>

<mosaic_0001>
module attributes {stable_mosaic.version = 11 : i64} {
  func.func @_dwconv_kernel(%arg0: i32, %arg1: i32, %arg2: memref<9xf32, #tpu.memory_space<smem>>, %arg3: memref<1x4x16x16xf32, #tpu.memory_space<vmem>>, %arg4: memref<1x4x16x16xf32, #tpu.memory_space<vmem>>, %arg5: memref<4x18x18xf32, #tpu.memory_space<vmem>>) attributes {dimension_semantics = [#tpu.dimension_semantics<parallel>, #tpu.dimension_semantics<parallel>], iteration_bounds = array<i64: 2, 1>, scalar_prefetch = 0 : i64, scratch_operands = 1 : i64, tpu.core_type = #tpu.core_type<tc>, window_params = [{transform_indices = @transform_0, window_bounds = array<i64: 9>}, {transform_indices = @transform_1, window_bounds = array<i64: 1, 4, 16, 16>}, {transform_indices = @transform_2, window_bounds = array<i64: 1, 4, 16, 16>}]} {
    %cst = arith.constant 0.000000e+00 : f32
    %0 = vector.broadcast %cst : f32 to vector<4x1x18xf32>
    %c0 = arith.constant 0 : index
    %c0_0 = arith.constant 0 : index
    %c0_1 = arith.constant 0 : index
    %1 = vector.load %arg5[%c0, %c0_0, %c0_1] : memref<4x18x18xf32, #tpu.memory_space<vmem>>, vector<4x1x18xf32>
    tpu.vector_store %arg5[%c0, %c0_0, %c0_1], %0 {strides = array<i32>} : memref<4x18x18xf32, #tpu.memory_space<vmem>>, vector<4x1x18xf32>,
    %cst_2 = arith.constant 0.000000e+00 : f32
    %2 = vector.broadcast %cst_2 : f32 to vector<4x1x18xf32>
    %c0_3 = arith.constant 0 : index
    %c17 = arith.constant 17 : index
    %c0_4 = arith.constant 0 : index
    %3 = vector.load %arg5[%c0_3, %c17, %c0_4] : memref<4x18x18xf32, #tpu.memory_space<vmem>>, vector<4x1x18xf32>
    tpu.vector_store %arg5[%c0_3, %c17, %c0_4], %2 {strides = array<i32>} : memref<4x18x18xf32, #tpu.memory_space<vmem>>, vector<4x1x18xf32>,
    %cst_5 = arith.constant 0.000000e+00 : f32
    %4 = vector.broadcast %cst_5 : f32 to vector<4x16x1xf32>
    %c0_6 = arith.constant 0 : index
    %c1 = arith.constant 1 : index
    %c0_7 = arith.constant 0 : index
    %5 = vector.load %arg5[%c0_6, %c1, %c0_7] : memref<4x18x18xf32, #tpu.memory_space<vmem>>, vector<4x16x1xf32>
    tpu.vector_store %arg5[%c0_6, %c1, %c0_7], %4 {strides = array<i32>} : memref<4x18x18xf32, #tpu.memory_space<vmem>>, vector<4x16x1xf32>,
    %cst_8 = arith.constant 0.000000e+00 : f32
    %6 = vector.broadcast %cst_8 : f32 to vector<4x16x1xf32>
    %c0_9 = arith.constant 0 : index
    %c1_10 = arith.constant 1 : index
    %c17_11 = arith.constant 17 : index
    %7 = vector.load %arg5[%c0_9, %c1_10, %c17_11] : memref<4x18x18xf32, #tpu.memory_space<vmem>>, vector<4x16x1xf32>
    tpu.vector_store %arg5[%c0_9, %c1_10, %c17_11], %6 {strides = array<i32>} : memref<4x18x18xf32, #tpu.memory_space<vmem>>, vector<4x16x1xf32>,
    %c0_12 = arith.constant 0 : index
    %c0_13 = arith.constant 0 : index
    %c0_14 = arith.constant 0 : index
    %c0_15 = arith.constant 0 : index
    %8 = vector.load %arg3[%c0_12, %c0_13, %c0_14, %c0_15] : memref<1x4x16x16xf32, #tpu.memory_space<vmem>>, vector<1x4x16x16xf32>
    %9 = vector.shape_cast %8 : vector<1x4x16x16xf32> to vector<4x16x16xf32>
    %c0_16 = arith.constant 0 : index
    %c1_17 = arith.constant 1 : index
    %c1_18 = arith.constant 1 : index
    %10 = vector.load %arg5[%c0_16, %c1_17, %c1_18] : memref<4x18x18xf32, #tpu.memory_space<vmem>>, vector<4x16x16xf32>
    tpu.vector_store %arg5[%c0_16, %c1_17, %c1_18], %9 {strides = array<i32>} : memref<4x18x18xf32, #tpu.memory_space<vmem>>, vector<4x16x16xf32>,
    %c0_19 = arith.constant 0 : index
    %11 = memref.load %arg2[%c0_19] : memref<9xf32, #tpu.memory_space<smem>>
    %c1_20 = arith.constant 1 : index
    %12 = memref.load %arg2[%c1_20] : memref<9xf32, #tpu.memory_space<smem>>
    %c2 = arith.constant 2 : index
    %13 = memref.load %arg2[%c2] : memref<9xf32, #tpu.memory_space<smem>>
    %c3 = arith.constant 3 : index
    %14 = memref.load %arg2[%c3] : memref<9xf32, #tpu.memory_space<smem>>
    %c4 = arith.constant 4 : index
    %15 = memref.load %arg2[%c4] : memref<9xf32, #tpu.memory_space<smem>>
    %c5 = arith.constant 5 : index
    %16 = memref.load %arg2[%c5] : memref<9xf32, #tpu.memory_space<smem>>
    %c6 = arith.constant 6 : index
    %17 = memref.load %arg2[%c6] : memref<9xf32, #tpu.memory_space<smem>>
    %c7 = arith.constant 7 : index
    %18 = memref.load %arg2[%c7] : memref<9xf32, #tpu.memory_space<smem>>
    %c8 = arith.constant 8 : index
    %19 = memref.load %arg2[%c8] : memref<9xf32, #tpu.memory_space<smem>>
    %c0_i32 = arith.constant 0 : i32
    %c4_i32 = arith.constant 4 : i32
    %20 = arith.addi %c0_i32, %c4_i32 : i32
    %c1_i32 = arith.constant 1 : i32
    scf.for %arg6 = %c0_i32 to %20 step %c1_i32  : i32 {
      %c0_i32_22 = arith.constant 0 : i32
      %c2_i32 = arith.constant 2 : i32
      %21 = arith.addi %c0_i32_22, %c2_i32 : i32
      %c1_i32_23 = arith.constant 1 : i32
      scf.for %arg7 = %c0_i32_22 to %21 step %c1_i32_23  : i32 {
        %c8_i32 = arith.constant 8 : i32
        %22 = arith.muli %arg7, %c8_i32 : i32
        %c8_i32_25 = arith.constant 8 : i32
        %23 = arith.minsi %22, %c8_i32_25 : i32
        %c0_i32_26 = arith.constant 0 : i32
        %24 = arith.addi %23, %c0_i32_26 : i32
        %25 = arith.index_cast %arg6 : i32 to index
        %26 = arith.index_cast %24 : i32 to index
        %c0_27 = arith.constant 0 : index
        %27 = vector.load %arg5[%25, %26, %c0_27] : memref<4x18x18xf32, #tpu.memory_space<vmem>>, vector<1x8x16xf32>
        %28 = vector.shape_cast %27 : vector<1x8x16xf32> to vector<8x16xf32>
        %29 = vector.broadcast %11 : f32 to vector<8x16xf32>
        %30 = arith.mulf %29, %28 : vector<8x16xf32>
        %c0_i32_28 = arith.constant 0 : i32
        %31 = arith.addi %23, %c0_i32_28 : i32
        %32 = arith.index_cast %arg6 : i32 to index
        %33 = arith.index_cast %31 : i32 to index
        %c1_29 = arith.constant 1 : index
        %34 = vector.load %arg5[%32, %33, %c1_29] : memref<4x18x18xf32, #tpu.memory_space<vmem>>, vector<1x8x16xf32>
        %35 = vector.shape_cast %34 : vector<1x8x16xf32> to vector<8x16xf32>
        %36 = vector.broadcast %12 : f32 to vector<8x16xf32>
        %37 = arith.mulf %36, %35 : vector<8x16xf32>
        %38 = arith.addf %30, %37 : vector<8x16xf32>
        %c0_i32_30 = arith.constant 0 : i32
        %39 = arith.addi %23, %c0_i32_30 : i32
        %40 = arith.index_cast %arg6 : i32 to index
        %41 = arith.index_cast %39 : i32 to index
        %c2_31 = arith.constant 2 : index
        %42 = vector.load %arg5[%40, %41, %c2_31] : memref<4x18x18xf32, #tpu.memory_space<vmem>>, vector<1x8x16xf32>
        %43 = vector.shape_cast %42 : vector<1x8x16xf32> to vector<8x16xf32>
        %44 = vector.broadcast %13 : f32 to vector<8x16xf32>
        %45 = arith.mulf %44, %43 : vector<8x16xf32>
        %46 = arith.addf %38, %45 : vector<8x16xf32>
        %c1_i32_32 = arith.constant 1 : i32
        %47 = arith.addi %23, %c1_i32_32 : i32
        %48 = arith.index_cast %arg6 : i32 to index
        %49 = arith.index_cast %47 : i32 to index
        %c0_33 = arith.constant 0 : index
        %50 = vector.load %arg5[%48, %49, %c0_33] : memref<4x18x18xf32, #tpu.memory_space<vmem>>, vector<1x8x16xf32>
        %51 = vector.shape_cast %50 : vector<1x8x16xf32> to vector<8x16xf32>
        %52 = vector.broadcast %14 : f32 to vector<8x16xf32>
        %53 = arith.mulf %52, %51 : vector<8x16xf32>
        %54 = arith.addf %46, %53 : vector<8x16xf32>
        %c1_i32_34 = arith.constant 1 : i32
        %55 = arith.addi %23, %c1_i32_34 : i32
        %56 = arith.index_cast %arg6 : i32 to index
        %57 = arith.index_cast %55 : i32 to index
        %c1_35 = arith.constant 1 : index
        %58 = vector.load %arg5[%56, %57, %c1_35] : memref<4x18x18xf32, #tpu.memory_space<vmem>>, vector<1x8x16xf32>
        %59 = vector.shape_cast %58 : vector<1x8x16xf32> to vector<8x16xf32>
        %60 = vector.broadcast %15 : f32 to vector<8x16xf32>
        %61 = arith.mulf %60, %59 : vector<8x16xf32>
        %62 = arith.addf %54, %61 : vector<8x16xf32>
        %c1_i32_36 = arith.constant 1 : i32
        %63 = arith.addi %23, %c1_i32_36 : i32
        %64 = arith.index_cast %arg6 : i32 to index
        %65 = arith.index_cast %63 : i32 to index
        %c2_37 = arith.constant 2 : index
        %66 = vector.load %arg5[%64, %65, %c2_37] : memref<4x18x18xf32, #tpu.memory_space<vmem>>, vector<1x8x16xf32>
        %67 = vector.shape_cast %66 : vector<1x8x16xf32> to vector<8x16xf32>
        %68 = vector.broadcast %16 : f32 to vector<8x16xf32>
        %69 = arith.mulf %68, %67 : vector<8x16xf32>
        %70 = arith.addf %62, %69 : vector<8x16xf32>
        %c2_i32_38 = arith.constant 2 : i32
        %71 = arith.addi %23, %c2_i32_38 : i32
        %72 = arith.index_cast %arg6 : i32 to index
        %73 = arith.index_cast %71 : i32 to index
        %c0_39 = arith.constant 0 : index
        %74 = vector.load %arg5[%72, %73, %c0_39] : memref<4x18x18xf32, #tpu.memory_space<vmem>>, vector<1x8x16xf32>
        %75 = vector.shape_cast %74 : vector<1x8x16xf32> to vector<8x16xf32>
        %76 = vector.broadcast %17 : f32 to vector<8x16xf32>
        %77 = arith.mulf %76, %75 : vector<8x16xf32>
        %78 = arith.addf %70, %77 : vector<8x16xf32>
        %c2_i32_40 = arith.constant 2 : i32
        %79 = arith.addi %23, %c2_i32_40 : i32
        %80 = arith.index_cast %arg6 : i32 to index
        %81 = arith.index_cast %79 : i32 to index
        %c1_41 = arith.constant 1 : index
        %82 = vector.load %arg5[%80, %81, %c1_41] : memref<4x18x18xf32, #tpu.memory_space<vmem>>, vector<1x8x16xf32>
        %83 = vector.shape_cast %82 : vector<1x8x16xf32> to vector<8x16xf32>
        %84 = vector.broadcast %18 : f32 to vector<8x16xf32>
        %85 = arith.mulf %84, %83 : vector<8x16xf32>
        %86 = arith.addf %78, %85 : vector<8x16xf32>
        %c2_i32_42 = arith.constant 2 : i32
        %87 = arith.addi %23, %c2_i32_42 : i32
        %88 = arith.index_cast %arg6 : i32 to index
        %89 = arith.index_cast %87 : i32 to index
        %c2_43 = arith.constant 2 : index
        %90 = vector.load %arg5[%88, %89, %c2_43] : memref<4x18x18xf32, #tpu.memory_space<vmem>>, vector<1x8x16xf32>
        %91 = vector.shape_cast %90 : vector<1x8x16xf32> to vector<8x16xf32>
        %92 = vector.broadcast %19 : f32 to vector<8x16xf32>
        %93 = arith.mulf %92, %91 : vector<8x16xf32>
        %94 = arith.addf %86, %93 : vector<8x16xf32>
        %c0_44 = arith.constant 0 : index
        %95 = arith.index_cast %arg6 : i32 to index
        %96 = arith.index_cast %23 : i32 to index
        %c0_45 = arith.constant 0 : index
        %97 = vector.load %arg4[%c0_44, %95, %96, %c0_45] : memref<1x4x16x16xf32, #tpu.memory_space<vmem>>, vector<1x1x8x16xf32>
        %98 = vector.shape_cast %97 : vector<1x1x8x16xf32> to vector<8x16xf32>
        %99 = vector.shape_cast %94 : vector<8x16xf32> to vector<1x1x8x16xf32>
        tpu.vector_store %arg4[%c0_44, %95, %96, %c0_45], %99 {strides = array<i32>} : memref<1x4x16x16xf32, #tpu.memory_space<vmem>>, vector<1x1x8x16xf32>,
      }
      %c2_i32_24 = arith.constant 2 : i32
    }
    %c4_i32_21 = arith.constant 4 : i32
    return
  }
  func.func @transform_0(%arg0: i32, %arg1: i32) -> i32 {
    %c0_i32 = arith.constant 0 : i32
    %c0_i32_0 = arith.constant 0 : i32
    return %c0_i32 : i32
  }
  func.func @transform_1(%arg0: i32, %arg1: i32) -> (i32, i32, i32, i32) {
    %c0_i32 = arith.constant 0 : i32
    %c0_i32_0 = arith.constant 0 : i32
    %c0_i32_1 = arith.constant 0 : i32
    return %arg0, %arg1, %c0_i32, %c0_i32_0 : i32, i32, i32, i32
  }
  func.func @transform_2(%arg0: i32, %arg1: i32) -> (i32, i32, i32, i32) {
    %c0_i32 = arith.constant 0 : i32
    %c0_i32_0 = arith.constant 0 : i32
    %c0_i32_1 = arith.constant 0 : i32
    return %arg0, %arg1, %c0_i32, %c0_i32_0 : i32, i32, i32, i32
  }
}

</mosaic_0001>

<llo_original>
// kernel: tpu_custom_call.1
$region0: #{tpu_custom_call.1}
  #allocation0 [shape = 'u32[]', space=smem, size = 0x4, offset = 0x4, fixed_abs, tag = 'smem constant byte address 0x4 - core index']
  #allocation1 [shape = 'u32[72,128]{1,0:T(1,128)}', space=vmem, size = 0x9000, scoped, tag = 'internal scratch']
  #allocation2 [shape = 'f32[4,18,18]{2,1,0:T(8,128)}', space=vmem, size = 0xc000, scoped, tag = 'scratch operand']
  %s0 = inlined_call_operand.hbm [shape: f32[9], index: 0, kind: input, shape index: {}]
  %s1 = inlined_call_operand.hbm [shape: f32[2,4,16,16], index: 1, kind: input, shape index: {}]
  %s2 = inlined_call_operand.hbm [shape: f32[2,4,16,16], index: 2, kind: output, shape index: {}]
  %s3 = sld [smem:[#allocation0]]
  $region63: #{tpu_custom_call.1} parent=0
    _
  %s5 = ssub.s32 1, %s3
  %s6 = scalar_select 0, %s5, %s3
  $region1: #{tpu_custom_call.1} parent=0
    #allocation3 [shape = 'u8[512]{0}', space=smem, size = 0x200, scoped, tag = 'input window, operand 0, single buffered']
    #allocation4 [shape = 's32[2]{0}', space=sflag, size = 0x8, scoped, tag = 'scoped memory for tpu_custom_call.1']
    #allocation5 [shape = 's32[2]{0}', space=sflag, size = 0x8, scoped, tag = 'scoped memory for tpu_custom_call.1']
    #allocation6 [shape = 's32[2]{0}', space=sflag, size = 0x8, scoped, tag = 'scoped memory for tpu_custom_call.1']
    #allocation7 [shape = 'u8[65536]{0}', space=vmem, size = 0x10000, scoped, tag = 'input window, operand 1']
    #allocation8 [shape = 'u8[65536]{0}', space=vmem, size = 0x10000, scoped, tag = 'output window, operand 0']
    %7 = vsyncpa [#allocation6], 0
    %8 = vsyncpa [#allocation4], 0
    %s9 = scalar_lea.sflag [#allocation4], 1
    %10 = vsyncpa %s9, 0
    %11 = vsyncpa [#allocation5], 0
    %s12 = scalar_lea.sflag [#allocation5], 1
    %13 = vsyncpa %s12, 0
    loop: start=0, step=1, limit=4
    $region2: #{tpu_custom_call.1} parent=1 // loop_pre_header
      _
    $region3: #{tpu_custom_call.1} parent=1 // loop_header
      %s15 = sphi 0, %s19
      %p16 = scmp.ge.s32.totalorder %s15, 4
      %s22 = sphi 0, %s34
      %s23 = sphi 0, %s30
      %s24 = sphi 0, %s22
      %s25 = sphi 0, %s23
      %s26 = sphi 0, %s24
      %s27 = sphi 0, %s25
      %s35 = sphi 0, %s35
      %s37 = sphi 0, %s35
      %s38 = sphi 0, %s37
      %s52 = sphi 0, %s38
      %s60 = sphi 0, %s62
      %s63 = sphi 0, %s60
      %s64 = sphi 0, %s63
      %s80 = sphi 0, %s64
      %s88 = sphi 0, %s90
      %s91 = sphi 0, %s88
      %s92 = sphi 0, %s91
      %s108 = sphi 0, %s92
    $region4: #{tpu_custom_call.1} parent=1 // loop_header_branch
      %18 = sbr.rel (%p16) target = $region8
    $region5: #{tpu_custom_call.1} parent=1 // loop_body
      %s20 = ssub.s32 %s15, 1
      %s21 = ssub.s32 %s15, 2
      %s28 = sadd.s32 1, %s23
      %p29 = scmp.ge.s32.totalorder %s28, 1
      %s30 = scalar_select %p29, 0, %s28
      %s31 = sadd.s32 1, %s22
      %s32 = scalar_select %p29, %s31, %s22
      %p33 = scmp.ge.s32.totalorder %s32, 2
      %s34 = scalar_select %p33, 0, %s32
      %s36 = sadd.s32 %s35, 1
      %p39 = scmp.eq.s32.totalorder %s15, 1
      %p40 = scmp.ne.s32.totalorder %s35, %s37
      %p41 = scmp.eq.s32.totalorder %s15, 0
      %p42 = por %p40, %p41
      %p43 = scmp.ne.s32.totalorder %s35, %s37
      %p44 = scmp.eq.s32.totalorder %s20, 1
      %p45 = por %p43, %p44
      %p46 = scmp.ne.s32.totalorder %s37, %s38
      %p47 = scmp.eq.s32.totalorder %s20, 0
      %p48 = por %p46, %p47
      %p49 = scmp.ne.s32.totalorder %s37, %s38
      %p50 = scmp.eq.s32.totalorder %s21, 1
      %p51 = por %p49, %p50
      %p53 = scmp.ne.s32.totalorder %s38, %s52
      %p54 = scmp.eq.s32.totalorder %s21, 0
      %p55 = por %p53, %p54
      %s56 = ssub.s32 %s22, %s34
      %s57 = ssub.s32 %s23, %s30
      %s58 = sor.u32 %s56, %s57
      %p59 = scmp.eq.s32.totalorder %s58, 0
      %s61 = sadd.s32 %s60, 1
      %s62 = scalar_select %p59, %s60, %s61
      %p65 = pneg %p59
      %p66 = scmp.eq.s32.totalorder %s15, 1
      %p67 = por %p65, %p66
      %p68 = scmp.ne.s32.totalorder %s60, %s63
      %p69 = scmp.eq.s32.totalorder %s15, 0
      %p70 = por %p68, %p69
      %p71 = scmp.ne.s32.totalorder %s60, %s63
      %p72 = scmp.eq.s32.totalorder %s20, 1
      %p73 = por %p71, %p72
      %p74 = scmp.ne.s32.totalorder %s63, %s64
      %p75 = scmp.eq.s32.totalorder %s20, 0
      %p76 = por %p74, %p75
      %p77 = scmp.ne.s32.totalorder %s63, %s64
      %p78 = scmp.eq.s32.totalorder %s21, 1
      %p79 = por %p77, %p78
      %p81 = scmp.ne.s32.totalorder %s64, %s80
      %p82 = scmp.eq.s32.totalorder %s21, 0
      %p83 = por %p81, %p82
      %s84 = ssub.s32 %s22, %s34
      %s85 = ssub.s32 %s23, %s30
      %s86 = sor.u32 %s84, %s85
      %p87 = scmp.eq.s32.totalorder %s86, 0
      %s89 = sadd.s32 %s88, 1
      %s90 = scalar_select %p87, %s88, %s89
      %p93 = pneg %p87
      %p94 = scmp.eq.s32.totalorder %s15, 1
      %p95 = por %p93, %p94
      %p96 = scmp.ne.s32.totalorder %s88, %s91
      %p97 = scmp.eq.s32.totalorder %s15, 0
      %p98 = por %p96, %p97
      %p99 = scmp.ne.s32.totalorder %s88, %s91
      %p100 = scmp.eq.s32.totalorder %s20, 1
      %p101 = por %p99, %p100
      %p102 = scmp.ne.s32.totalorder %s91, %s92
      %p103 = scmp.eq.s32.totalorder %s20, 0
      %p104 = por %p102, %p103
      %p105 = scmp.ne.s32.totalorder %s91, %s92
      %p106 = scmp.eq.s32.totalorder %s21, 1
      %p107 = por %p105, %p106
      %p109 = scmp.ne.s32.totalorder %s92, %s108
      %p110 = scmp.eq.s32.totalorder %s21, 0
      %p111 = por %p109, %p110
      %p112 = scmp.le.s32.totalorder 1, %s15
      %p113 = scmp.lt.s32.totalorder %s15, 3
      %p114 = pnand %p112, %p113
      %p115 = pneg %p114
      // Predicated region
      $region9: #{tpu_custom_call.1} parent=5 // pred_check
        _
      $region10: #{tpu_custom_call.1} parent=5 // pred_check_branch
        %117 = sbr.rel (%p114) target = $region12
      $region11: #{tpu_custom_call.1} parent=5 // pred_region
        %s118 = ssub.s32 %s15, 1
        // Predicated region
        $region13: #{tpu_custom_call.1} parent=11 // pred_check
          %p119 = pneg %p48
        $region14: #{tpu_custom_call.1} parent=11 // pred_check_branch
          %121 = sbr.rel (%p119) target = $region16
        $region15: #{tpu_custom_call.1} parent=11 // pred_region
          %123 = vsyncadd [#allocation6], 0
          %s125 = sshll.u32 %s0, 4
          %s126 = int_to_ptr.hbm [resolvable:$true] %s125
          %128 = dma.hbm_to_smem %s126, 16, [#allocation3], [#allocation6]
        $region16: #{tpu_custom_call.1} parent=11 // pred_fallthru
          _
      $region12: #{tpu_custom_call.1} parent=5 // pred_fallthru
        _
      %p129 = scmp.lt.s32.totalorder %s15, 2
      // Predicated region
      $region17: #{tpu_custom_call.1} parent=5 // pred_check
        %p130 = pneg %p129
      $region18: #{tpu_custom_call.1} parent=5 // pred_check_branch
        %132 = sbr.rel (%p130) target = $region20
      $region19: #{tpu_custom_call.1} parent=5 // pred_region
        // Predicated region
        $region21: #{tpu_custom_call.1} parent=19 // pred_check
          %p133 = pneg %p70
        $region22: #{tpu_custom_call.1} parent=19 // pred_check_branch
          %135 = sbr.rel (%p133) target = $region24
        $region23: #{tpu_custom_call.1} parent=19 // pred_region
          %s136 = sand.u32 %s60, 1
          %s137 = scalar_lea.sflag [#allocation4], %s136
          %s138 = sand.u32 %s60, 1
          %s139 = smul.addr %s138, 64
          %s140 = scalar_lea.vmem [#allocation7], %s139
          %s141 = smul.u32 4, %s23
          %143 = vsyncadd %s137, 0
          %s144 = smul.addr %s141, 2
          %s145 = smul.addr %s22, 8
          %s146 = sadd.s32 %s144, %s145
          %s147 = smul.addr %s146, 8
          %s148 = scalar_lea.hbm %s1, %s147
          %s149 = sshll.u32 %s148, 4
          %s150 = int_to_ptr.hbm [resolvable:$true] %s149
          %s151 = sshll.u32 %s140, 4
          %s152 = int_to_ptr.vmem [resolvable:$true] %s151
          %157 = dma.hbm_to_vmem [thread:$0]  %s150, 1024, %s152, %s137, 128, 128, 8
        $region24: #{tpu_custom_call.1} parent=19 // pred_fallthru
          _
      $region20: #{tpu_custom_call.1} parent=5 // pred_fallthru
        _
      %p158 = scmp.le.s32.totalorder 1, %s15
      %p159 = scmp.lt.s32.totalorder %s15, 3
      %p160 = pnand %p158, %p159
      %p161 = pneg %p160
      // Predicated region
      $region25: #{tpu_custom_call.1} parent=5 // pred_check
        _
      $region26: #{tpu_custom_call.1} parent=5 // pred_check_branch
        %163 = sbr.rel (%p160) target = $region28
      $region27: #{tpu_custom_call.1} parent=5 // pred_region
        %s164 = ssub.s32 %s15, 1
        // Predicated region
        $region29: #{tpu_custom_call.1} parent=27 // pred_check
          %p165 = pneg %p48
        $region30: #{tpu_custom_call.1} parent=27 // pred_check_branch
          %167 = sbr.rel (%p165) target = $region32
        $region31: #{tpu_custom_call.1} parent=27 // pred_region
          %169 = dma.done [#allocation6], 16
        $region32: #{tpu_custom_call.1} parent=27 // pred_fallthru
          _
        %s170 = sand.u32 %s63, 1
        %s171 = scalar_lea.sflag [#allocation4], %s170
        %s172 = sand.u32 %s63, 1
        %s173 = smul.addr %s172, 64
        %s174 = scalar_lea.vmem [#allocation7], %s173
        // Predicated region
        $region33: #{tpu_custom_call.1} parent=27 // pred_check
          %p175 = pneg %p76
        $region34: #{tpu_custom_call.1} parent=27 // pred_check_branch
          %177 = sbr.rel (%p175) target = $region36
        $region35: #{tpu_custom_call.1} parent=27 // pred_region
          %179 = dma.done %s171, 1024
        $region36: #{tpu_custom_call.1} parent=27 // pred_fallthru
          _
        %180 = sfence
        %p181 = pneg %p48
        %p182 = pneg %p45
        %s183 = sand.u32 %s63, 1
        %s184 = scalar_lea.sflag [#allocation4], %s183
        %s185 = sand.u32 %s63, 1
        %s186 = smul.addr %s185, 64
        %s187 = scalar_lea.vmem [#allocation7], %s186
        %p188 = pneg %p76
        %p189 = pneg %p73
        %p190 = pneg %p104
        %p191 = pneg %p101
        %s192 = sand.u32 %s91, 1
        %s193 = scalar_lea.sflag [#allocation5], %s192
        %s194 = sand.u32 %s91, 1
        %s195 = smul.addr %s194, 64
        %s196 = scalar_lea.vmem [#allocation8], %s195
        %s197 = smul.u32 4, %s25
        %s198 = smul.u32 4, %s25
        %vm199 = vcmask 139264
        %200 = vst.msk [vmem:[#allocation2] sm:$0x1] %vm199, 0.0
        %201 = vst.msk [vmem:[#allocation2 + $0x18] sm:$0x1] %vm199, 0.0
        %202 = vst.msk [vmem:[#allocation2 + $0x30] sm:$0x1] %vm199, 0.0
        %203 = vst.msk [vmem:[#allocation2 + $0x48] sm:$0x1] %vm199, 0.0
        %204 = vst.msk [vmem:[#allocation2 + $0x11] sm:$0x1] %vm199, 0.0
        %205 = vst.msk [vmem:[#allocation2 + $0x29] sm:$0x1] %vm199, 0.0
        %206 = vst.msk [vmem:[#allocation2 + $0x41] sm:$0x1] %vm199, 0.0
        %207 = vst.msk [vmem:[#allocation2 + $0x59] sm:$0x1] %vm199, 0.0
        %vm208 = vcmask 7168
        %209 = vst.msk [vmem:[#allocation2 + $0x1] sm:$0xff] %vm208, 0.0
        %210 = vst.msk [vmem:[#allocation2 + $0x9] sm:$0xff] %vm208, 0.0
        %211 = vst.msk [vmem:[#allocation2 + $0x19] sm:$0xff] %vm208, 0.0
        %212 = vst.msk [vmem:[#allocation2 + $0x21] sm:$0xff] %vm208, 0.0
        %213 = vst.msk [vmem:[#allocation2 + $0x31] sm:$0xff] %vm208, 0.0
        %214 = vst.msk [vmem:[#allocation2 + $0x39] sm:$0xff] %vm208, 0.0
        %215 = vst.msk [vmem:[#allocation2 + $0x49] sm:$0xff] %vm208, 0.0
        %216 = vst.msk [vmem:[#allocation2 + $0x51] sm:$0xff] %vm208, 0.0
        %vm217 = vcmask 146568
        %218 = vst.msk [vmem:[#allocation2 + $0x1] sm:$0xff] %vm217, 0.0
        %219 = vst.msk [vmem:[#allocation2 + $0x9] sm:$0xff] %vm217, 0.0
        %220 = vst.msk [vmem:[#allocation2 + $0x19] sm:$0xff] %vm217, 0.0
        %221 = vst.msk [vmem:[#allocation2 + $0x21] sm:$0xff] %vm217, 0.0
        %222 = vst.msk [vmem:[#allocation2 + $0x31] sm:$0xff] %vm217, 0.0
        %223 = vst.msk [vmem:[#allocation2 + $0x39] sm:$0xff] %vm217, 0.0
        %224 = vst.msk [vmem:[#allocation2 + $0x49] sm:$0xff] %vm217, 0.0
        %225 = vst.msk [vmem:[#allocation2 + $0x51] sm:$0xff] %vm217, 0.0
        %v226 = vld [vmem:[%s174] sm:$0xff]
        %v227 = vld [vmem:[%s174 + $0x8] sm:$0xff]
        %v228 = vld [vmem:[%s174 + $0x10] sm:$0xff]
        %v229 = vld [vmem:[%s174 + $0x18] sm:$0xff]
        %v230 = vld [vmem:[%s174 + $0x20] sm:$0xff]
        %v231 = vld [vmem:[%s174 + $0x28] sm:$0xff]
        %v232 = vld [vmem:[%s174 + $0x30] sm:$0xff]
        %v233 = vld [vmem:[%s174 + $0x38] sm:$0xff]
        %242 = vrot.lane.b32.xlu0 %v226, 1
        %v243 = vpop.permute.xlu0 %242
        %244 = vrot.lane.b32.xlu0 %v227, 1
        %v245 = vpop.permute.xlu0 %244
        %246 = vrot.lane.b32.xlu0 %v228, 1
        %v247 = vpop.permute.xlu0 %246
        %248 = vrot.lane.b32.xlu0 %v229, 1
        %v249 = vpop.permute.xlu0 %248
        %250 = vrot.lane.b32.xlu0 %v230, 1
        %v251 = vpop.permute.xlu0 %250
        %252 = vrot.lane.b32.xlu0 %v231, 1
        %v253 = vpop.permute.xlu0 %252
        %254 = vrot.lane.b32.xlu0 %v232, 1
        %v255 = vpop.permute.xlu0 %254
        %256 = vrot.lane.b32.xlu0 %v233, 1
        %v257 = vpop.permute.xlu0 %256
        %vm266 = vcmask 138248
        %267 = vst.msk [vmem:[#allocation2 + $0x1] sm:$0xff] %vm266, %v243
        %268 = vst.msk [vmem:[#allocation2 + $0x9] sm:$0xff] %vm266, %v245
        %269 = vst.msk [vmem:[#allocation2 + $0x19] sm:$0xff] %vm266, %v247
        %270 = vst.msk [vmem:[#allocation2 + $0x21] sm:$0xff] %vm266, %v249
        %271 = vst.msk [vmem:[#allocation2 + $0x31] sm:$0xff] %vm266, %v251
        %272 = vst.msk [vmem:[#allocation2 + $0x39] sm:$0xff] %vm266, %v253
        %273 = vst.msk [vmem:[#allocation2 + $0x49] sm:$0xff] %vm266, %v255
        %274 = vst.msk [vmem:[#allocation2 + $0x51] sm:$0xff] %vm266, %v257
        %s275 = sld [smem:[#allocation3]]
        %s276 = sld [smem:[#allocation3 + $0x1]]
        %s277 = sld [smem:[#allocation3 + $0x2]]
        %s278 = sld [smem:[#allocation3 + $0x3]]
        %s279 = sld [smem:[#allocation3 + $0x4]]
        %s280 = sld [smem:[#allocation3 + $0x5]]
        %s281 = sld [smem:[#allocation3 + $0x6]]
        %s282 = sld [smem:[#allocation3 + $0x7]]
        %s283 = sld [smem:[#allocation3 + $0x8]]
        loop: start=0, step=1, limit=4
        $region37: #{tpu_custom_call.1} parent=27 // loop_pre_header
          _
        $region38: #{tpu_custom_call.1} parent=27 // loop_header
          %s285 = sphi 0, %s289
          %p286 = scmp.ge.s32.totalorder %s285, 4
        $region39: #{tpu_custom_call.1} parent=27 // loop_header_branch
          %288 = sbr.rel (%p286) target = $region43
        $region40: #{tpu_custom_call.1} parent=27 // loop_body
          loop: start=0, step=1, limit=2
          $region44: #{tpu_custom_call.1} parent=40 // loop_pre_header
            _
          $region45: #{tpu_custom_call.1} parent=40 // loop_header
            %s291 = sphi 0, %s295
            %p292 = scmp.ge.s32.totalorder %s291, 2
          $region46: #{tpu_custom_call.1} parent=40 // loop_header_branch
            %294 = sbr.rel (%p292) target = $region50
          $region47: #{tpu_custom_call.1} parent=40 // loop_body
            %s296 = smul.u32 %s291, 8
            %p297 = scmp.lt.s32.totalorder %s296, 8
            %s298 = scalar_select %p297, %s296, 8
            %s299 = smul.u32 %s285, 24
            %s300 = sadd.s32 %s298, %s299
            %s301 = scalar_lea.vmem [#allocation2], %s300
            %v302 = vld [vmem:[%s301] sm:$0xff]
            %v303 = vstv %s275
            %v304 = vmul.f32 %v303, %v302
            %v305 = vstv %s276
            %v306 = vmul.f32 %v305, %v302
            %308 = vrot.lane.b32.xlu0 %v306, 127
            %v309 = vpop.permute.xlu0 %308
            %v311 = vadd.f32 %v304, %v309
            %v312 = vstv %s277
            %v313 = vmul.f32 %v312, %v302
            %315 = vrot.lane.b32.xlu0 %v313, 126
            %v316 = vpop.permute.xlu0 %315
            %v318 = vadd.f32 %v311, %v316
            %s319 = sadd.s32 %s298, 1
            %s320 = sadd.s32 %s319, %s299
            %s321 = scalar_lea.vmem [#allocation2], %s320
            %v322 = vld [vmem:[%s321] sm:$0xff]
            %v323 = vstv %s278
            %v324 = vmul.f32 %v323, %v322
            %v325 = vadd.f32 %v318, %v324
            %v326 = vstv %s279
            %v327 = vmul.f32 %v326, %v322
            %329 = vrot.lane.b32.xlu0 %v327, 127
            %v330 = vpop.permute.xlu0 %329
            %v332 = vadd.f32 %v325, %v330
            %v333 = vstv %s280
            %v334 = vmul.f32 %v333, %v322
            %336 = vrot.lane.b32.xlu0 %v334, 126
            %v337 = vpop.permute.xlu0 %336
            %v339 = vadd.f32 %v332, %v337
            %s340 = sadd.s32 %s298, 2
            %s341 = sadd.s32 %s340, %s299
            %s342 = scalar_lea.vmem [#allocation2], %s341
            %v343 = vld [vmem:[%s342] sm:$0xff]
            %v344 = vstv %s281
            %v345 = vmul.f32 %v344, %v343
            %v346 = vadd.f32 %v339, %v345
            %v347 = vstv %s282
            %v348 = vmul.f32 %v347, %v343
            %350 = vrot.lane.b32.xlu0 %v348, 127
            %v351 = vpop.permute.xlu0 %350
            %v353 = vadd.f32 %v346, %v351
            %v354 = vstv %s283
            %v355 = vmul.f32 %v354, %v343
            %357 = vrot.lane.b32.xlu0 %v355, 126
            %v358 = vpop.permute.xlu0 %357
            %v360 = vadd.f32 %v353, %v358
            %s361 = smul.u32 %s285, 16
            %s362 = sadd.s32 %s298, %s361
            %s363 = scalar_lea.vmem %s196, %s362 [#allocation8]
            %vm364 = vcmask 130048
            %365 = vst.msk [vmem:[%s363] sm:$0xff] %vm364, %v360
          $region48: #{tpu_custom_call.1} parent=40 // loop_footer
            %s295 = sadd.s32 1, %s291
          $region49: #{tpu_custom_call.1} parent=40 // loop_footer_branch
            %290 = sbr.rel target = $region45
          $region50: #{tpu_custom_call.1} parent=40 // loop_exit
            _
        $region41: #{tpu_custom_call.1} parent=27 // loop_footer
          %s289 = sadd.s32 1, %s285
        $region42: #{tpu_custom_call.1} parent=27 // loop_footer_branch
          %284 = sbr.rel target = $region38
        $region43: #{tpu_custom_call.1} parent=27 // loop_exit
          _
        %s366 = sand.u32 %s91, 1
        %s367 = scalar_lea.sflag [#allocation5], %s366
        %s368 = sand.u32 %s91, 1
        %s369 = smul.addr %s368, 64
        %s370 = scalar_lea.vmem [#allocation8], %s369
        // Predicated region
        $region51: #{tpu_custom_call.1} parent=27 // pred_check
          %p371 = pneg %p101
        $region52: #{tpu_custom_call.1} parent=27 // pred_check_branch
          %373 = sbr.rel (%p371) target = $region54
        $region53: #{tpu_custom_call.1} parent=27 // pred_region
          %s374 = smul.u32 4, %s25
          %376 = vsyncadd %s367, 0
          %s377 = smul.addr %s374, 2
          %s378 = smul.addr %s24, 8
          %s379 = sadd.s32 %s377, %s378
          %s380 = smul.addr %s379, 8
          %s381 = scalar_lea.hbm %s2, %s380
          %s382 = sshll.u32 %s370, 4
          %s383 = int_to_ptr.vmem [resolvable:$true] %s382
          %s384 = sshll.u32 %s381, 4
          %s385 = int_to_ptr.hbm [resolvable:$true] %s384
          %390 = dma.vmem_to_hbm [thread:$0]  %s383, 1024, %s385, %s367, 128, 128, 8
        $region54: #{tpu_custom_call.1} parent=27 // pred_fallthru
          _
      $region28: #{tpu_custom_call.1} parent=5 // pred_fallthru
        _
      %p391 = scmp.le.s32.totalorder 2, %s15
      // Predicated region
      $region55: #{tpu_custom_call.1} parent=5 // pred_check
        %p392 = pneg %p391
      $region56: #{tpu_custom_call.1} parent=5 // pred_check_branch
        %394 = sbr.rel (%p392) target = $region58
      $region57: #{tpu_custom_call.1} parent=5 // pred_region
        %s395 = ssub.s32 %s15, 2
        // Predicated region
        $region59: #{tpu_custom_call.1} parent=57 // pred_check
          %p396 = pneg %p107
        $region60: #{tpu_custom_call.1} parent=57 // pred_check_branch
          %398 = sbr.rel (%p396) target = $region62
        $region61: #{tpu_custom_call.1} parent=57 // pred_region
          %s399 = sand.u32 %s92, 1
          %s400 = scalar_lea.sflag [#allocation5], %s399
          %s401 = sand.u32 %s92, 1
          %s402 = smul.addr %s401, 64
          %s403 = scalar_lea.vmem [#allocation8], %s402
          %405 = dma.done %s400, 1024
        $region62: #{tpu_custom_call.1} parent=57 // pred_fallthru
          _
      $region58: #{tpu_custom_call.1} parent=5 // pred_fallthru
        _
    $region6: #{tpu_custom_call.1} parent=1 // loop_footer
      %s19 = sadd.s32 1, %s15
    $region7: #{tpu_custom_call.1} parent=1 // loop_footer_branch
      %14 = sbr.rel target = $region3
    $region8: #{tpu_custom_call.1} parent=1 // loop_exit
      _
    %406 = vsyncpa [#allocation4], 1
    %s407 = scalar_lea.sflag [#allocation4], 1
    %408 = vsyncpa %s407, 1
    %409 = vsyncpa [#allocation5], 1
    %s410 = scalar_lea.sflag [#allocation5], 1
    %411 = vsyncpa %s410, 1
    %412 = vsyncpa [#allocation6], 1
    %s413 = scalar_lea.sflag [#allocation6], 1
    %414 = vsyncpa %s413, 1

</llo_original>
